<compile_context>
chip_gen: v7x
topology: tpu7x:2x2x1
jax: 0.10.0
libtpu: 0.0.40
codegen_flags: <defaults>
</compile_context>

<pallas_src>
import functools

import jax
import jax.numpy as jnp
from jax import lax
from jax.experimental import pallas as pl
from jax.experimental.pallas import tpu as pltpu

IGNORE_LABEL = 255
MAX_TILE_P = 32768           # lane-tile upper bound (multiple of 128)
PRED_BLOCK_BUDGET = 4 << 20  # ~4 MiB per predict block (x2 for double-buffering)


def _choose_tile_p(hw, c, itemsize):
    """Largest lane tile whose double-buffered predict block stays well under
    every generation's scoped-VMEM default (v5e 16 MiB ... v7x 32 MiB)."""
    max_lanes = (PRED_BLOCK_BUDGET // max(1, c * itemsize)) // 128 * 128
    tile = int(min(MAX_TILE_P, max(128, max_lanes)))
    if hw <= tile:
        return hw            # single tile per image; block == full dim is legal
    return tile              # multiple of 128; ragged tail masked in-kernel


def _ce2d_kernel(pred_ref, tgt_ref, sum_ref, cnt_ref, *,
                 ignore_label, hw, tile_p):
    # pred_ref: (C, TILE_P) native dtype, tgt_ref: (1, TILE_P) int32
    # sum_ref / cnt_ref: (1, 1) f32 per-batch accumulators (resident across i)
    i = pl.program_id(1)

    @pl.when(i == 0)
    def _init():
        sum_ref[...] = jnp.zeros_like(sum_ref)
        cnt_ref[...] = jnp.zeros_like(cnt_ref)

    x = pred_ref[...].astype(jnp.float32)                     # (C, TP)
    t = tgt_ref[...]                                          # (1, TP)

    valid = jnp.logical_and(t >= 0, t != ignore_label)        # (1, TP)
    if hw % tile_p != 0:
        # Mask out-of-bounds lanes of the ragged last tile (no wrapper padding).
        lane = lax.broadcasted_iota(jnp.int32, t.shape, 1)
        valid = jnp.logical_and(valid, i * tile_p + lane < hw)

    # log-sum-exp over the class (sublane) axis, computed in f32.
    m = jnp.max(x, axis=0, keepdims=True)                     # (1, TP)
    lse = m + jnp.log(jnp.sum(jnp.exp(x - m), axis=0, keepdims=True))

    # gather x[t] per pixel via one-hot select over the class axis.
    cls = lax.broadcasted_iota(jnp.int32, x.shape, 0)          # (C, TP)
    tgt_logit = jnp.sum(jnp.where(cls == t, x, 0.0), axis=0, keepdims=True)

    per_pixel = jnp.where(valid, lse - tgt_logit, 0.0)         # (1, TP)

    sum_ref[...] += jnp.sum(per_pixel, axis=1, keepdims=True)
    cnt_ref[...] += jnp.sum(valid.astype(jnp.float32), axis=1, keepdims=True)


def cross_entropy_2d(predict, target, *, ignore_label=IGNORE_LABEL,
                     size_average=True, max_tile_p=MAX_TILE_P):
    """predict: (N, C, H, W) float (any float dtype), target: (N, H, W) int.

    Matches PyTorch CrossEntropy2d.forward with weight=None.
    """
    # TODO(synk): per-class `weight` rescaling not implemented (weight=None path only).
    n, c, h, w = predict.shape
    assert target.shape == (n, h, w)
    hw = h * w

    # Free reshapes only — no transpose, no padding, no dtype change in HBM.
    pred3 = predict.reshape(n, c, hw)                          # (N, C, HW)
    tgt3 = target.reshape(n, 1, hw).astype(jnp.int32)          # (N, 1, HW)

    itemsize = jnp.dtype(predict.dtype).itemsize
    tile_p = min(_choose_tile_p(hw, c, itemsize), max(128, max_tile_p))
    if hw <= tile_p:
        tile_p = hw
    num_tiles = pl.cdiv(hw, tile_p)

    kernel = functools.partial(_ce2d_kernel, ignore_label=ignore_label,
                               hw=hw, tile_p=tile_p)

    loss_sum, valid_cnt = pl.pallas_call(
        kernel,
        out_shape=(jax.ShapeDtypeStruct((n, 1, 1), jnp.float32),
                   jax.ShapeDtypeStruct((n, 1, 1), jnp.float32)),
        grid_spec=pltpu.PrefetchScalarGridSpec(
            num_scalar_prefetch=0,
            grid=(n, num_tiles),
            in_specs=[
                pl.BlockSpec((None, c, tile_p), lambda b, i: (b, 0, i)),
                pl.BlockSpec((None, 1, tile_p), lambda b, i: (b, 0, i)),
            ],
            out_specs=[
                pl.BlockSpec((None, 1, 1), lambda b, i: (b, 0, 0)),
                pl.BlockSpec((None, 1, 1), lambda b, i: (b, 0, 0)),
            ],
        ),
        compiler_params=pltpu.CompilerParams(
            dimension_semantics=("parallel", "arbitrary")),
    )(pred3, tgt3)

    s = jnp.sum(loss_sum)
    cnt = jnp.sum(valid_cnt)
    if size_average:
        return jnp.where(cnt > 0, s / jnp.maximum(cnt, 1.0), 0.0)
    return s


def _reference(predict, target, ignore_label=IGNORE_LABEL):
    n, c, h, w = predict.shape
    x = jnp.transpose(predict, (0, 2, 3, 1)).reshape(-1, c).astype(jnp.float32)
    t = target.reshape(-1).astype(jnp.int32)
    valid = jnp.logical_and(t >= 0, t != ignore_label)
    lse = jax.scipy.special.logsumexp(x, axis=-1)
    tl = jnp.take_along_axis(x, jnp.clip(t, 0, c - 1)[:, None], axis=-1)[:, 0]
    per = jnp.where(valid, lse - tl, 0.0)
    cnt = jnp.sum(valid.astype(jnp.float32))
    return jnp.where(cnt > 0, jnp.sum(per) / jnp.maximum(cnt, 1.0), 0.0)


if __name__ == "__main__":
    key = jax.random.PRNGKey(0)
    k1, k2, k3, k4, k5, k6 = jax.random.split(key, 6)

    # --- main test: small segmentation-like shapes ---
    N, C, H, W = 2, 4, 16, 16
    predict = jax.random.normal(k1, (N, C, H, W), dtype=jnp.float32)
    target = jax.random.randint(k2, (N, H, W), 0, C, dtype=jnp.int32)
    ignore_mask = jax.random.bernoulli(k3, 0.2, (N, H, W))
    target = jnp.where(ignore_mask, IGNORE_LABEL, target)

    loss = jax.block_until_ready(cross_entropy_2d(predict, target))
    ref = _reference(predict, target)
    assert jnp.allclose(loss, ref, rtol=1e-5, atol=1e-5), (loss, ref)

    # --- native-bf16 path (upcast happens in-kernel, not at the boundary) ---
    predict_bf16 = predict.astype(jnp.bfloat16)
    loss_bf16 = jax.block_until_ready(cross_entropy_2d(predict_bf16, target))
    ref_bf16 = _reference(predict_bf16.astype(jnp.float32), target)
    assert jnp.allclose(loss_bf16, ref_bf16, rtol=1e-3, atol=1e-3), (loss_bf16, ref_bf16)

    # --- ragged-tail path: hw not a multiple of the (forced small) lane tile ---
    N2, C2, H2, W2 = 2, 4, 24, 24            # hw = 576 -> tiles of 256 + tail 64
    predict2 = jax.random.normal(k4, (N2, C2, H2, W2), dtype=jnp.float32)
    target2 = jax.random.randint(k5, (N2, H2, W2), 0, C2, dtype=jnp.int32)
    target2 = jnp.where(jax.random.bernoulli(k6, 0.2, (N2, H2, W2)),
                        IGNORE_LABEL, target2)
    loss2 = jax.block_until_ready(
        cross_entropy_2d(predict2, target2, max_tile_p=256))
    ref2 = _reference(predict2, target2)
    assert jnp.allclose(loss2, ref2, rtol=1e-5, atol=1e-5), (loss2, ref2)

    print("KERNEL_OK")
</pallas_src>

<mosaic_0001>
module attributes {stable_mosaic.version = 11 : i64} {
  func.func @_ce2d_kernel(%arg0: i32, %arg1: i32, %arg2: memref<1x4x256xf32, #tpu.memory_space<vmem>>, %arg3: memref<1x1x256xi32, #tpu.memory_space<vmem>>, %arg4: memref<1x1x1xf32, #tpu.memory_space<vmem>>, %arg5: memref<1x1x1xf32, #tpu.memory_space<vmem>>) attributes {dimension_semantics = [#tpu.dimension_semantics<parallel>, #tpu.dimension_semantics<arbitrary>], iteration_bounds = array<i64: 2, 1>, scalar_prefetch = 0 : i64, scratch_operands = 0 : i64, tpu.core_type = #tpu.core_type<tc>, window_params = [{transform_indices = @transform_0, window_bounds = array<i64: 1, 4, 256>}, {transform_indices = @transform_1, window_bounds = array<i64: 1, 1, 256>}, {transform_indices = @transform_2, window_bounds = array<i64: 1, 1, 1>}, {transform_indices = @transform_3, window_bounds = array<i64: 1, 1, 1>}]} {
    %c0_i32 = arith.constant 0 : i32
    %0 = arith.cmpi eq, %arg1, %c0_i32 : i32
    %1 = arith.extui %0 : i1 to i32
    %c0_i32_0 = arith.constant 0 : i32
    %2 = arith.cmpi ne, %1, %c0_i32_0 : i32
    scf.if %2 {
      %cst_25 = arith.constant 0.000000e+00 : f32
      %49 = vector.broadcast %cst_25 : f32 to vector<1x1xf32>
      %c0_26 = arith.constant 0 : index
      %c0_27 = arith.constant 0 : index
      %c0_28 = arith.constant 0 : index
      %50 = vector.load %arg4[%c0_26, %c0_27, %c0_28] : memref<1x1x1xf32, #tpu.memory_space<vmem>>, vector<1x1x1xf32>
      %51 = vector.shape_cast %50 : vector<1x1x1xf32> to vector<1x1xf32>
      %52 = vector.shape_cast %49 : vector<1x1xf32> to vector<1x1x1xf32>
      tpu.vector_store %arg4[%c0_26, %c0_27, %c0_28], %52 {strides = array<i32>} : memref<1x1x1xf32, #tpu.memory_space<vmem>>, vector<1x1x1xf32>,
      %cst_29 = arith.constant 0.000000e+00 : f32
      %53 = vector.broadcast %cst_29 : f32 to vector<1x1xf32>
      %c0_30 = arith.constant 0 : index
      %c0_31 = arith.constant 0 : index
      %c0_32 = arith.constant 0 : index
      %54 = vector.load %arg5[%c0_30, %c0_31, %c0_32] : memref<1x1x1xf32, #tpu.memory_space<vmem>>, vector<1x1x1xf32>
      %55 = vector.shape_cast %54 : vector<1x1x1xf32> to vector<1x1xf32>
      %56 = vector.shape_cast %53 : vector<1x1xf32> to vector<1x1x1xf32>
      tpu.vector_store %arg5[%c0_30, %c0_31, %c0_32], %56 {strides = array<i32>} : memref<1x1x1xf32, #tpu.memory_space<vmem>>, vector<1x1x1xf32>,
    } else {
    }
    %c0 = arith.constant 0 : index
    %c0_1 = arith.constant 0 : index
    %c0_2 = arith.constant 0 : index
    %3 = vector.load %arg2[%c0, %c0_1, %c0_2] : memref<1x4x256xf32, #tpu.memory_space<vmem>>, vector<1x4x256xf32>
    %4 = vector.shape_cast %3 : vector<1x4x256xf32> to vector<4x256xf32>
    %c0_3 = arith.constant 0 : index
    %c0_4 = arith.constant 0 : index
    %c0_5 = arith.constant 0 : index
    %5 = vector.load %arg3[%c0_3, %c0_4, %c0_5] : memref<1x1x256xi32, #tpu.memory_space<vmem>>, vector<1x1x256xi32>
    %6 = vector.shape_cast %5 : vector<1x1x256xi32> to vector<1x256xi32>
    %c0_i32_6 = arith.constant 0 : i32
    %7 = vector.broadcast %c0_i32_6 : i32 to vector<1x256xi32>
    %8 = arith.cmpi sge, %6, %7 : vector<1x256xi32>
    %c255_i32 = arith.constant 255 : i32
    %9 = vector.broadcast %c255_i32 : i32 to vector<1x256xi32>
    %10 = arith.cmpi ne, %6, %9 : vector<1x256xi32>
    %11 = arith.andi %8, %10 : vector<1x256xi1>
    %cst = arith.constant dense<0xFF800000> : vector<256xf32>
    %12 = vector.multi_reduction <maximumf>, %4, %cst [0] : vector<4x256xf32> to vector<256xf32>
    %13 = vector.shape_cast %12 : vector<256xf32> to vector<1x256xf32>
    %14 = vector.broadcast %13 : vector<1x256xf32> to vector<4x256xf32>
    %15 = arith.subf %4, %14 : vector<4x256xf32>
    %16 = math.exp %15 : vector<4x256xf32>
    %cst_7 = arith.constant dense<0.000000e+00> : vector<256xf32>
    %17 = vector.multi_reduction <add>, %16, %cst_7 [0] : vector<4x256xf32> to vector<256xf32>
    %18 = vector.shape_cast %17 : vector<256xf32> to vector<1x256xf32>
    %19 = math.log %18 : vector<1x256xf32>
    %20 = arith.addf %13, %19 : vector<1x256xf32>
    %21 = tpu.iota {dimensions = array<i32: 0>} : vector<4x256xi32>
    %22 = vector.broadcast %6 : vector<1x256xi32> to vector<4x256xi32>
    %23 = arith.cmpi eq, %21, %22 : vector<4x256xi32>
    %cst_8 = arith.constant 0.000000e+00 : f32
    %24 = vector.broadcast %cst_8 : f32 to vector<4x256xf32>
    %25 = arith.select %23, %4, %24 : vector<4x256xi1>, vector<4x256xf32>
    %cst_9 = arith.constant dense<0.000000e+00> : vector<256xf32>
    %26 = vector.multi_reduction <add>, %25, %cst_9 [0] : vector<4x256xf32> to vector<256xf32>
    %27 = vector.shape_cast %26 : vector<256xf32> to vector<1x256xf32>
    %28 = arith.subf %20, %27 : vector<1x256xf32>
    %cst_10 = arith.constant 0.000000e+00 : f32
    %29 = vector.broadcast %cst_10 : f32 to vector<1x256xf32>
    %30 = arith.select %11, %28, %29 : vector<1x256xi1>, vector<1x256xf32>
    %c0_11 = arith.constant 0 : index
    %c0_12 = arith.constant 0 : index
    %c0_13 = arith.constant 0 : index
    %31 = vector.load %arg4[%c0_11, %c0_12, %c0_13] : memref<1x1x1xf32, #tpu.memory_space<vmem>>, vector<1x1x1xf32>
    %32 = vector.shape_cast %31 : vector<1x1x1xf32> to vector<1x1xf32>
    %cst_14 = arith.constant dense<0.000000e+00> : vector<1xf32>
    %33 = vector.multi_reduction <add>, %30, %cst_14 [1] : vector<1x256xf32> to vector<1xf32>
    %34 = vector.shape_cast %33 : vector<1xf32> to vector<1x1xf32>
    %35 = arith.addf %32, %34 : vector<1x1xf32>
    %c0_15 = arith.constant 0 : index
    %c0_16 = arith.constant 0 : index
    %c0_17 = arith.constant 0 : index
    %36 = vector.load %arg4[%c0_15, %c0_16, %c0_17] : memref<1x1x1xf32, #tpu.memory_space<vmem>>, vector<1x1x1xf32>
    %37 = vector.shape_cast %36 : vector<1x1x1xf32> to vector<1x1xf32>
    %38 = vector.shape_cast %35 : vector<1x1xf32> to vector<1x1x1xf32>
    tpu.vector_store %arg4[%c0_15, %c0_16, %c0_17], %38 {strides = array<i32>} : memref<1x1x1xf32, #tpu.memory_space<vmem>>, vector<1x1x1xf32>,
    %c0_18 = arith.constant 0 : index
    %c0_19 = arith.constant 0 : index
    %c0_20 = arith.constant 0 : index
    %39 = vector.load %arg5[%c0_18, %c0_19, %c0_20] : memref<1x1x1xf32, #tpu.memory_space<vmem>>, vector<1x1x1xf32>
    %40 = vector.shape_cast %39 : vector<1x1x1xf32> to vector<1x1xf32>
    %41 = arith.extui %11 : vector<1x256xi1> to vector<1x256xi32>
    %42 = arith.sitofp %41 : vector<1x256xi32> to vector<1x256xf32>
    %cst_21 = arith.constant dense<0.000000e+00> : vector<1xf32>
    %43 = vector.multi_reduction <add>, %42, %cst_21 [1] : vector<1x256xf32> to vector<1xf32>
    %44 = vector.shape_cast %43 : vector<1xf32> to vector<1x1xf32>
    %45 = arith.addf %40, %44 : vector<1x1xf32>
    %c0_22 = arith.constant 0 : index
    %c0_23 = arith.constant 0 : index
    %c0_24 = arith.constant 0 : index
    %46 = vector.load %arg5[%c0_22, %c0_23, %c0_24] : memref<1x1x1xf32, #tpu.memory_space<vmem>>, vector<1x1x1xf32>
    %47 = vector.shape_cast %46 : vector<1x1x1xf32> to vector<1x1xf32>
    %48 = vector.shape_cast %45 : vector<1x1xf32> to vector<1x1x1xf32>
    tpu.vector_store %arg5[%c0_22, %c0_23, %c0_24], %48 {strides = array<i32>} : memref<1x1x1xf32, #tpu.memory_space<vmem>>, vector<1x1x1xf32>,
    return
  }
  func.func @transform_0(%arg0: i32, %arg1: i32) -> (i32, i32, i32) {
    %c0_i32 = arith.constant 0 : i32
    %c0_i32_0 = arith.constant 0 : i32
    return %arg0, %c0_i32, %arg1 : i32, i32, i32
  }
  func.func @transform_1(%arg0: i32, %arg1: i32) -> (i32, i32, i32) {
    %c0_i32 = arith.constant 0 : i32
    %c0_i32_0 = arith.constant 0 : i32
    return %arg0, %c0_i32, %arg1 : i32, i32, i32
  }
  func.func @transform_2(%arg0: i32, %arg1: i32) -> (i32, i32, i32) {
    %c0_i32 = arith.constant 0 : i32
    %c0_i32_0 = arith.constant 0 : i32
    %c0_i32_1 = arith.constant 0 : i32
    return %arg0, %c0_i32, %c0_i32_0 : i32, i32, i32
  }
  func.func @transform_3(%arg0: i32, %arg1: i32) -> (i32, i32, i32) {
    %c0_i32 = arith.constant 0 : i32
    %c0_i32_0 = arith.constant 0 : i32
    %c0_i32_1 = arith.constant 0 : i32
    return %arg0, %c0_i32, %c0_i32_0 : i32, i32, i32
  }
}

</mosaic_0001>

<llo_original>
// kernel: tpu_custom_call.1
$region0: #{tpu_custom_call.1}
  #allocation0 [shape = 'u32[]', space=smem, size = 0x4, offset = 0x4, fixed_abs, tag = 'smem constant byte address 0x4 - core index']
  #allocation1 [shape = 'u32[144,128]{1,0:T(1,128)}', space=vmem, size = 0x12000, scoped, tag = 'internal scratch']
  %s0 = inlined_call_operand.hbm [shape: f32[2,4,256], index: 0, kind: input, shape index: {}]
  %s1 = inlined_call_operand.hbm [shape: s32[2,1,256], index: 1, kind: input, shape index: {}]
  %s2 = inlined_call_operand.vmem [shape: f32[2,1,1], index: 2, kind: output, shape index: {0}]
  %s3 = inlined_call_operand.vmem [shape: f32[2,1,1], index: 3, kind: output, shape index: {1}]
  %4 = xla_tuple %s2, %s3
  %s5 = sld [smem:[#allocation0]]
  $region61: #{tpu_custom_call.1} parent=0
    _
  %s7 = ssub.s32 1, %s5
  %s8 = scalar_select 0, %s7, %s5
  $region1: #{tpu_custom_call.1} parent=0
    #allocation2 [shape = 'u8[8192]{0}', space=vmem, size = 0x2000, scoped, tag = 'input window, operand 0']
    #allocation3 [shape = 's32[2]{0}', space=sflag, size = 0x8, scoped, tag = 'scoped memory for tpu_custom_call.1']
    #allocation4 [shape = 'u8[2048]{0}', space=vmem, size = 0x800, scoped, tag = 'input window, operand 1']
    #allocation5 [shape = 's32[2]{0}', space=sflag, size = 0x8, scoped, tag = 'scoped memory for tpu_custom_call.1']
    %9 = vsyncpa [#allocation3], 0
    %s10 = scalar_lea.sflag [#allocation3], 1
    %11 = vsyncpa %s10, 0
    %12 = vsyncpa [#allocation5], 0
    %s13 = scalar_lea.sflag [#allocation5], 1
    %14 = vsyncpa %s13, 0
    loop: start=0, step=1, limit=4
    $region2: #{tpu_custom_call.1} parent=1 // loop_pre_header
      _
    $region3: #{tpu_custom_call.1} parent=1 // loop_header
      %s16 = sphi 0, %s20
      %p17 = scmp.ge.s32.totalorder %s16, 4
      %s23 = sphi 0, %s35
      %s24 = sphi 0, %s31
      %s25 = sphi 0, %s23
      %s26 = sphi 0, %s24
      %s27 = sphi 0, %s25
      %s28 = sphi 0, %s26
      %s40 = sphi 0, %s42
      %s43 = sphi 0, %s40
      %s44 = sphi 0, %s43
      %s60 = sphi 0, %s44
      %s68 = sphi 0, %s70
      %s71 = sphi 0, %s68
      %s72 = sphi 0, %s71
      %s88 = sphi 0, %s72
      %s94 = sphi 0, %s96
      %s97 = sphi 0, %s94
      %s98 = sphi 0, %s97
      %s114 = sphi 0, %s98
      %s120 = sphi 0, %s122
      %s123 = sphi 0, %s120
      %s124 = sphi 0, %s123
      %s140 = sphi 0, %s124
    $region4: #{tpu_custom_call.1} parent=1 // loop_header_branch
      %19 = sbr.rel (%p17) target = $region8
    $region5: #{tpu_custom_call.1} parent=1 // loop_body
      %s21 = ssub.s32 %s16, 1
      %s22 = ssub.s32 %s16, 2
      %s29 = sadd.s32 1, %s24
      %p30 = scmp.ge.s32.totalorder %s29, 1
      %s31 = scalar_select %p30, 0, %s29
      %s32 = sadd.s32 1, %s23
      %s33 = scalar_select %p30, %s32, %s23
      %p34 = scmp.ge.s32.totalorder %s33, 2
      %s35 = scalar_select %p34, 0, %s33
      %s36 = ssub.s32 %s23, %s35
      %s37 = ssub.s32 %s24, %s31
      %s38 = sor.u32 %s36, %s37
      %p39 = scmp.eq.s32.totalorder %s38, 0
      %s41 = sadd.s32 %s40, 1
      %s42 = scalar_select %p39, %s40, %s41
      %p45 = pneg %p39
      %p46 = scmp.eq.s32.totalorder %s16, 1
      %p47 = por %p45, %p46
      %p48 = scmp.ne.s32.totalorder %s40, %s43
      %p49 = scmp.eq.s32.totalorder %s16, 0
      %p50 = por %p48, %p49
      %p51 = scmp.ne.s32.totalorder %s40, %s43
      %p52 = scmp.eq.s32.totalorder %s21, 1
      %p53 = por %p51, %p52
      %p54 = scmp.ne.s32.totalorder %s43, %s44
      %p55 = scmp.eq.s32.totalorder %s21, 0
      %p56 = por %p54, %p55
      %p57 = scmp.ne.s32.totalorder %s43, %s44
      %p58 = scmp.eq.s32.totalorder %s22, 1
      %p59 = por %p57, %p58
      %p61 = scmp.ne.s32.totalorder %s44, %s60
      %p62 = scmp.eq.s32.totalorder %s22, 0
      %p63 = por %p61, %p62
      %s64 = ssub.s32 %s23, %s35
      %s65 = ssub.s32 %s24, %s31
      %s66 = sor.u32 %s64, %s65
      %p67 = scmp.eq.s32.totalorder %s66, 0
      %s69 = sadd.s32 %s68, 1
      %s70 = scalar_select %p67, %s68, %s69
      %p73 = pneg %p67
      %p74 = scmp.eq.s32.totalorder %s16, 1
      %p75 = por %p73, %p74
      %p76 = scmp.ne.s32.totalorder %s68, %s71
      %p77 = scmp.eq.s32.totalorder %s16, 0
      %p78 = por %p76, %p77
      %p79 = scmp.ne.s32.totalorder %s68, %s71
      %p80 = scmp.eq.s32.totalorder %s21, 1
      %p81 = por %p79, %p80
      %p82 = scmp.ne.s32.totalorder %s71, %s72
      %p83 = scmp.eq.s32.totalorder %s21, 0
      %p84 = por %p82, %p83
      %p85 = scmp.ne.s32.totalorder %s71, %s72
      %p86 = scmp.eq.s32.totalorder %s22, 1
      %p87 = por %p85, %p86
      %p89 = scmp.ne.s32.totalorder %s72, %s88
      %p90 = scmp.eq.s32.totalorder %s22, 0
      %p91 = por %p89, %p90
      %s92 = ssub.s32 %s23, %s35
      %p93 = scmp.eq.s32.totalorder %s92, 0
      %s95 = sadd.s32 %s94, 1
      %s96 = scalar_select %p93, %s94, %s95
      %p99 = pneg %p93
      %p100 = scmp.eq.s32.totalorder %s16, 1
      %p101 = por %p99, %p100
      %p102 = scmp.ne.s32.totalorder %s94, %s97
      %p103 = scmp.eq.s32.totalorder %s16, 0
      %p104 = por %p102, %p103
      %p105 = scmp.ne.s32.totalorder %s94, %s97
      %p106 = scmp.eq.s32.totalorder %s21, 1
      %p107 = por %p105, %p106
      %p108 = scmp.ne.s32.totalorder %s97, %s98
      %p109 = scmp.eq.s32.totalorder %s21, 0
      %p110 = por %p108, %p109
      %p111 = scmp.ne.s32.totalorder %s97, %s98
      %p112 = scmp.eq.s32.totalorder %s22, 1
      %p113 = por %p111, %p112
      %p115 = scmp.ne.s32.totalorder %s98, %s114
      %p116 = scmp.eq.s32.totalorder %s22, 0
      %p117 = por %p115, %p116
      %s118 = ssub.s32 %s23, %s35
      %p119 = scmp.eq.s32.totalorder %s118, 0
      %s121 = sadd.s32 %s120, 1
      %s122 = scalar_select %p119, %s120, %s121
      %p125 = pneg %p119
      %p126 = scmp.eq.s32.totalorder %s16, 1
      %p127 = por %p125, %p126
      %p128 = scmp.ne.s32.totalorder %s120, %s123
      %p129 = scmp.eq.s32.totalorder %s16, 0
      %p130 = por %p128, %p129
      %p131 = scmp.ne.s32.totalorder %s120, %s123
      %p132 = scmp.eq.s32.totalorder %s21, 1
      %p133 = por %p131, %p132
      %p134 = scmp.ne.s32.totalorder %s123, %s124
      %p135 = scmp.eq.s32.totalorder %s21, 0
      %p136 = por %p134, %p135
      %p137 = scmp.ne.s32.totalorder %s123, %s124
      %p138 = scmp.eq.s32.totalorder %s22, 1
      %p139 = por %p137, %p138
      %p141 = scmp.ne.s32.totalorder %s124, %s140
      %p142 = scmp.eq.s32.totalorder %s22, 0
      %p143 = por %p141, %p142
      %p144 = scmp.le.s32.totalorder 1, %s16
      %p145 = scmp.lt.s32.totalorder %s16, 3
      %p146 = pnand %p144, %p145
      %p147 = pneg %p146
      // Predicated region
      $region9: #{tpu_custom_call.1} parent=5 // pred_check
        _
      $region10: #{tpu_custom_call.1} parent=5 // pred_check_branch
        %149 = sbr.rel (%p146) target = $region12
      $region11: #{tpu_custom_call.1} parent=5 // pred_region
        %s150 = ssub.s32 %s16, 1
      $region12: #{tpu_custom_call.1} parent=5 // pred_fallthru
        _
      %p151 = scmp.lt.s32.totalorder %s16, 2
      // Predicated region
      $region13: #{tpu_custom_call.1} parent=5 // pred_check
        %p152 = pneg %p151
      $region14: #{tpu_custom_call.1} parent=5 // pred_check_branch
        %154 = sbr.rel (%p152) target = $region16
      $region15: #{tpu_custom_call.1} parent=5 // pred_region
        // Predicated region
        $region17: #{tpu_custom_call.1} parent=15 // pred_check
          %p155 = pneg %p50
        $region18: #{tpu_custom_call.1} parent=15 // pred_check_branch
          %157 = sbr.rel (%p155) target = $region20
        $region19: #{tpu_custom_call.1} parent=15 // pred_region
          %s158 = sand.u32 %s40, 1
          %s159 = scalar_lea.sflag [#allocation3], %s158
          %s160 = sand.u32 %s40, 1
          %s161 = smul.addr %s160, 8
          %s162 = scalar_lea.vmem [#allocation2], %s161
          %s163 = smul.u32 2, %s24
          %s165 = ssub.s32 128, 128
          %166 = vsyncadd %s159, %s165
          %s167 = smul.addr %s23, 2
          %s168 = sadd.s32 %s163, %s167
          %s169 = smul.addr %s168, 64
          %s170 = scalar_lea.hbm %s0, %s169
          %s172 = sshll.u32 %s162, 4
          %s173 = int_to_ptr.vmem [resolvable:$true] %s172
          %175 = dma.hbm_to_vmem [thread:$0]  %s170, 128, %s173, %s159
        $region20: #{tpu_custom_call.1} parent=15 // pred_fallthru
          _
        // Predicated region
        $region21: #{tpu_custom_call.1} parent=15 // pred_check
          %p176 = pneg %p78
        $region22: #{tpu_custom_call.1} parent=15 // pred_check_branch
          %178 = sbr.rel (%p176) target = $region24
        $region23: #{tpu_custom_call.1} parent=15 // pred_region
          %s179 = sand.u32 %s68, 1
          %s180 = scalar_lea.sflag [#allocation5], %s179
          %s181 = sand.u32 %s68, 1
          %s182 = smul.addr %s181, 2
          %s183 = scalar_lea.vmem [#allocation4], %s182
          %s184 = smul.u32 2, %s24
          %s186 = ssub.s32 32, 32
          %187 = vsyncadd %s180, %s186
          %s188 = smul.addr %s23, 2
          %s189 = sadd.s32 %s184, %s188
          %s190 = smul.addr %s189, 16
          %s191 = scalar_lea.hbm %s1, %s190
          %s193 = sshll.u32 %s183, 4
          %s194 = int_to_ptr.vmem [resolvable:$true] %s193
          %196 = dma.hbm_to_vmem [thread:$0]  %s191, 32, %s194, %s180
        $region24: #{tpu_custom_call.1} parent=15 // pred_fallthru
          _
      $region16: #{tpu_custom_call.1} parent=5 // pred_fallthru
        _
      %p197 = scmp.le.s32.totalorder 1, %s16
      %p198 = scmp.lt.s32.totalorder %s16, 3
      %p199 = pnand %p197, %p198
      %p200 = pneg %p199
      // Predicated region
      $region25: #{tpu_custom_call.1} parent=5 // pred_check
        _
      $region26: #{tpu_custom_call.1} parent=5 // pred_check_branch
        %202 = sbr.rel (%p199) target = $region28
      $region27: #{tpu_custom_call.1} parent=5 // pred_region
        %s203 = ssub.s32 %s16, 1
        %s204 = sand.u32 %s43, 1
        %s205 = scalar_lea.sflag [#allocation3], %s204
        %s206 = sand.u32 %s43, 1
        %s207 = smul.addr %s206, 8
        %s208 = scalar_lea.vmem [#allocation2], %s207
        // Predicated region
        $region29: #{tpu_custom_call.1} parent=27 // pred_check
          %p209 = pneg %p56
        $region30: #{tpu_custom_call.1} parent=27 // pred_check_branch
          %211 = sbr.rel (%p209) target = $region32
        $region31: #{tpu_custom_call.1} parent=27 // pred_region
          %212 = dma.done %s205, 128
        $region32: #{tpu_custom_call.1} parent=27 // pred_fallthru
          _
        %s213 = sand.u32 %s71, 1
        %s214 = scalar_lea.sflag [#allocation5], %s213
        %s215 = sand.u32 %s71, 1
        %s216 = smul.addr %s215, 2
        %s217 = scalar_lea.vmem [#allocation4], %s216
        // Predicated region
        $region33: #{tpu_custom_call.1} parent=27 // pred_check
          %p218 = pneg %p84
        $region34: #{tpu_custom_call.1} parent=27 // pred_check_branch
          %220 = sbr.rel (%p218) target = $region36
        $region35: #{tpu_custom_call.1} parent=27 // pred_region
          %221 = dma.done %s214, 32
        $region36: #{tpu_custom_call.1} parent=27 // pred_fallthru
          _
        %s222 = sand.u32 %s43, 1
        %s223 = scalar_lea.sflag [#allocation3], %s222
        %s224 = sand.u32 %s43, 1
        %s225 = smul.addr %s224, 8
        %s226 = scalar_lea.vmem [#allocation2], %s225
        %p227 = pneg %p56
        %p228 = pneg %p53
        %s229 = sand.u32 %s71, 1
        %s230 = scalar_lea.sflag [#allocation5], %s229
        %s231 = sand.u32 %s71, 1
        %s232 = smul.addr %s231, 2
        %s233 = scalar_lea.vmem [#allocation4], %s232
        %p234 = pneg %p84
        %p235 = pneg %p81
        %p236 = pneg %p110
        %p237 = pneg %p107
        %p238 = scmp.lt.s32.totalorder %s25, 1
        %s239 = scalar_select %p238, %s25, 1
        %s240 = scalar_lea.vmem %s2, %s239
        %p241 = pneg %p136
        %p242 = pneg %p133
        %p243 = scmp.lt.s32.totalorder %s25, 1
        %s244 = scalar_select %p243, %s25, 1
        %s245 = scalar_lea.vmem %s3, %s244
        %s246 = smul.u32 2, %s26
        %s247 = smul.u32 2, %s26
        %p248 = scmp.lt.s32.totalorder %s25, 1
        %s249 = scalar_select %p248, %s25, 1
        %s250 = scalar_lea.vmem %s2, %s249
        %p251 = scmp.lt.s32.totalorder %s25, 1
        %s252 = scalar_select %p251, %s25, 1
        %s253 = scalar_lea.vmem %s3, %s252
        %p254 = scmp.eq.s32.totalorder %s26, 0
        // Predicated region
        $region37: #{tpu_custom_call.1} parent=27 // pred_check
          %p255 = pneg %p254
        $region38: #{tpu_custom_call.1} parent=27 // pred_check_branch
          %257 = sbr.rel (%p255) target = $region40
        $region39: #{tpu_custom_call.1} parent=27 // pred_region
          %vm258 = vcmask 0
          %259 = vst.msk [vmem:[%s250] sm:$0x1] %vm258, 0.0
          %260 = vst.msk [vmem:[%s253] sm:$0x1] %vm258, 0.0
        $region40: #{tpu_custom_call.1} parent=27 // pred_fallthru
          _
        %v261 = vld [vmem:[%s208] sm:$0xff]
        %v262 = vld [vmem:[%s217] sm:$0x3]
        %vm263 = vcmp.ge.s32.totalorder %v262, 0
        %vm264 = vcmp.ne.s32.totalorder %v262, 255
        %vm265 = vmand %vm263, %vm264
        %v267 = vcombine.high %v261, %v261
        %vm269 = vcmask 1043456
        %v270 = vsel %vm269, %v261, -inf
        %v271 = vrot.slane %v270, 4
        %v272 = vmax.f32 %v270, %v271
        %v273 = vrot.slane %v272, 2
        %v274 = vmax.f32 %v272, %v273
        %v275 = vrot.slane %v274, 1
        %v276 = vmax.f32 %v274, %v275
        %v277 = vsel %vm269, %v267, -inf
        %v278 = vrot.slane %v277, 4
        %v279 = vmax.f32 %v277, %v278
        %v280 = vrot.slane %v279, 2
        %v281 = vmax.f32 %v279, %v280
        %v282 = vrot.slane %v281, 1
        %v283 = vmax.f32 %v281, %v282
        %v286 = vcombine.low %v276, %v283
        %v288 = vsub.f32 %v261, %v286
        %v289 = vmul.f32 %v288, 1.442695
        %v290 = vpow.pop %v289
        %v292 = vcombine.high %v290, %v290
        %v294 = vsel %vm269, %v290, 0.0
        %v295 = vrot.slane %v294, 4
        %v296 = vadd.f32 %v294, %v295
        %v297 = vrot.slane %v296, 2
        %v298 = vadd.f32 %v296, %v297
        %v299 = vrot.slane %v298, 1
        %v300 = vadd.f32 %v298, %v299
        %v301 = vsel %vm269, %v292, 0.0
        %v302 = vrot.slane %v301, 4
        %v303 = vadd.f32 %v301, %v302
        %v304 = vrot.slane %v303, 2
        %v305 = vadd.f32 %v303, %v304
        %v306 = vrot.slane %v305, 1
        %v307 = vadd.f32 %v305, %v306
        %v308 = vlog2.pop %v300
        %v309 = vmul.f32 %v308, 0.6931472
        %v310 = vlog2.pop %v307
        %v311 = vmul.f32 %v310, 0.6931472
        %v312 = vadd.f32 %v276, %v309
        %v313 = vadd.f32 %v283, %v311
        %v314 = vlaneseq
        %v315 = vshrl.u32 %v314, 7
        %v316 = vlaneseq
        %v317 = vshrl.u32 %v316, 7
        %v318 = vsub.s32 0, %v317
        %v319 = vrot.slane %v262, %v318
        %v320 = vlaneseq
        %v321 = vshrl.u32 %v320, 7
        %v322 = vsub.s32 1, %v321
        %v323 = vrot.slane %v262, %v322
        %vm324 = vcmp.eq.s32.totalorder %v315, %v319
        %vm325 = vcmp.eq.s32.totalorder %v315, %v323
        %v326 = vsel %vm324, %v261, 0.0
        %v327 = vsel %vm325, %v267, 0.0
        %v328 = vsel %vm269, %v326, 0.0
        %v329 = vrot.slane %v328, 4
        %v330 = vadd.f32 %v328, %v329
        %v331 = vrot.slane %v330, 2
        %v332 = vadd.f32 %v330, %v331
        %v333 = vrot.slane %v332, 1
        %v334 = vadd.f32 %v332, %v333
        %v335 = vsel %vm269, %v327, 0.0
        %v336 = vrot.slane %v335, 4
        %v337 = vadd.f32 %v335, %v336
        %v338 = vrot.slane %v337, 2
        %v339 = vadd.f32 %v337, %v338
        %v340 = vrot.slane %v339, 1
        %v341 = vadd.f32 %v339, %v340
        %v342 = vsub.f32 %v312, %v334
        %v343 = vsub.f32 %v313, %v341
        %v346 = vcombine.low %v342, %v343
        %v348 = vunpack.c.l.s4 1966171168
        %v349 = vunpack.c.0.s8 %v348
        %v350 = vlaneseq
        %v351 = vshrl.u32 %v350, 7
        %v352 = vsub.s32 %v349, %v351
        %v353 = vrot.slane %v346, %v352
        %v355 = vunpack.c.l.s4 1966171168
        %v356 = vunpack.c.0.s8 %v355
        %v357 = vlaneseq
        %v358 = vshrl.u32 %v357, 7
        %v359 = vsub.s32 %v356, %v358
        %v360 = vrot.slane %v353, %v359
        %v362 = vsel %vm265, %v360, 0.0
        %v363 = vld [vmem:[%s250] sm:$0x1]
        %v365 = vlaneseq
        %v366 = vshrl.u32 %v365, 7
        %v367 = vsub.s32 0, %v366
        %v368 = vrot.slane %v362, %v367
        %v369 = vlaneseq
        %v370 = vshrl.u32 %v369, 7
        %v371 = vsub.s32 1, %v370
        %v372 = vrot.slane %v362, %v371
        %vm375 = vcmask 1040384
        %v376 = vsel %vm375, %v368, 0.0
        %v377 = vsel %vm375, %v372, 0.0
        %v378 = vadd.f32 %v376, %v377
        %379 = vadd.xlane.f32.xlu0 %v378
        %v380 = vpop.xlane.xlu0 %379
        %v381 = vadd.f32 %v363, %v380
        %vm382 = vcmask 0
        %383 = vst.msk [vmem:[%s250] sm:$0x1] %vm382, %v381
        %v384 = vld [vmem:[%s253] sm:$0x1]
        %v385 = vsel %vm265, 1, 0
        %v386 = vcvt.s32.f32 %v385
        %v388 = vlaneseq
        %v389 = vshrl.u32 %v388, 7
        %v390 = vsub.s32 0, %v389
        %v391 = vrot.slane %v386, %v390
        %v392 = vlaneseq
        %v393 = vshrl.u32 %v392, 7
        %v394 = vsub.s32 1, %v393
        %v395 = vrot.slane %v386, %v394
        %v398 = vsel %vm375, %v391, 0.0
        %v399 = vsel %vm375, %v395, 0.0
        %v400 = vadd.f32 %v398, %v399
        %401 = vadd.xlane.f32.xlu0 %v400
        %v402 = vpop.xlane.xlu0 %401
        %v403 = vadd.f32 %v384, %v402
        %404 = vst.msk [vmem:[%s253] sm:$0x1] %vm382, %v403
        %p405 = scmp.lt.s32.totalorder %s25, 1
        %s406 = scalar_select %p405, %s25, 1
        %s407 = scalar_lea.vmem %s2, %s406
        %p408 = scmp.lt.s32.totalorder %s25, 1
        %s409 = scalar_select %p408, %s25, 1
        %s410 = scalar_lea.vmem %s3, %s409
        // Predicated region
        $region41: #{tpu_custom_call.1} parent=27 // pred_check
          %p411 = pneg %p107
        $region42: #{tpu_custom_call.1} parent=27 // pred_check_branch
          %413 = sbr.rel (%p411) target = $region44
        $region43: #{tpu_custom_call.1} parent=27 // pred_region
          _
        $region44: #{tpu_custom_call.1} parent=27 // pred_fallthru
          _
        // Predicated region
        $region45: #{tpu_custom_call.1} parent=27 // pred_check
          %p414 = pneg %p133
        $region46: #{tpu_custom_call.1} parent=27 // pred_check_branch
          %416 = sbr.rel (%p414) target = $region48
        $region47: #{tpu_custom_call.1} parent=27 // pred_region
          _
        $region48: #{tpu_custom_call.1} parent=27 // pred_fallthru
          _
      $region28: #{tpu_custom_call.1} parent=5 // pred_fallthru
        _
      %p417 = scmp.le.s32.totalorder 2, %s16
      // Predicated region
      $region49: #{tpu_custom_call.1} parent=5 // pred_check
        %p418 = pneg %p417
      $region50: #{tpu_custom_call.1} parent=5 // pred_check_branch
        %420 = sbr.rel (%p418) target = $region52
      $region51: #{tpu_custom_call.1} parent=5 // pred_region
        %s421 = ssub.s32 %s16, 2
        // Predicated region
        $region53: #{tpu_custom_call.1} parent=51 // pred_check
          %p422 = pneg %p113
        $region54: #{tpu_custom_call.1} parent=51 // pred_check_branch
          %424 = sbr.rel (%p422) target = $region56
        $region55: #{tpu_custom_call.1} parent=51 // pred_region
          %p425 = scmp.lt.s32.totalorder %s27, 1
          %s426 = scalar_select %p425, %s27, 1
          %s427 = scalar_lea.vmem %s2, %s426
        $region56: #{tpu_custom_call.1} parent=51 // pred_fallthru
          _
        // Predicated region
        $region57: #{tpu_custom_call.1} parent=51 // pred_check
          %p428 = pneg %p139
        $region58: #{tpu_custom_call.1} parent=51 // pred_check_branch
          %430 = sbr.rel (%p428) target = $region60
        $region59: #{tpu_custom_call.1} parent=51 // pred_region
          %p431 = scmp.lt.s32.totalorder %s27, 1
          %s432 = scalar_select %p431, %s27, 1
          %s433 = scalar_lea.vmem %s3, %s432
        $region60: #{tpu_custom_call.1} parent=51 // pred_fallthru
          _
      $region52: #{tpu_custom_call.1} parent=5 // pred_fallthru
        _
    $region6: #{tpu_custom_call.1} parent=1 // loop_footer
      %s20 = sadd.s32 1, %s16
    $region7: #{tpu_custom_call.1} parent=1 // loop_footer_branch
      %15 = sbr.rel target = $region3
    $region8: #{tpu_custom_call.1} parent=1 // loop_exit
      _
    %434 = vsyncpa [#allocation3], 1
    %s435 = scalar_lea.sflag [#allocation3], 1
    %436 = vsyncpa %s435, 1
    %437 = vsyncpa [#allocation5], 1
    %s438 = scalar_lea.sflag [#allocation5], 1
    %439 = vsyncpa %s438, 1

</llo_original>
